<compile_context>
chip_gen: v7x
topology: tpu7x:2x2x1
jax: 0.10.0
libtpu: 0.0.40
codegen_flags: <defaults>
</compile_context>

<pallas_src>
import functools

import jax
import jax.numpy as jnp
from jax.experimental import pallas as pl
from jax.experimental.pallas import tpu as pltpu

INPUT_SIZE = 4
HID1 = 16
HID2 = 12
OUTPUT_SIZE = 3  # my_SecondHiddenLayer exists in __init__ but is unused in forward().


def _round_up(n, m):
    return ((n + m - 1) // m) * m


def _default_block_b():
    """Per-generation default batch-tile (lane) width.

    v6e/v7x: 64K columns (~16-20 MiB double-buffered tiles + f32 temps, under the
    32 MiB default scoped-VMEM limit); conservative 32K otherwise (v5e default
    scoped VMEM is 16 MiB, ~10 MiB used at 32K).
    """
    try:
        kind = jax.devices()[0].device_kind.lower()
    except Exception:
        kind = ""
    if "v6" in kind or "v7" in kind:
        return 65536
    return 32768


def _mlp_kernel(x_ref, w1_ref, b1_ref, w2_ref, b2_ref, o_ref, *, precision):
    # Batch on the lane (last) axis -> dense 128-lane loads/stores.
    # I/O may be bf16; all compute/accumulation is f32.
    x = x_ref[...].astype(jnp.float32)                                  # (4, TB)
    # Layer 1: (16,4) @ (4,TB).  Kernel is HBM-bound; MXU/VPU have slack.
    h1 = jnp.dot(w1_ref[...], x, precision=precision,
                 preferred_element_type=jnp.float32)                    # (16, TB)
    h1 = jnp.maximum(h1 + b1_ref[...], 0.0)                             # ReLU
    h2 = jnp.dot(w2_ref[...], h1, precision=precision,
                 preferred_element_type=jnp.float32)                    # (12, TB)
    o_ref[...] = jnp.maximum(h2 + b2_ref[...], 0.0).astype(o_ref.dtype)


def ann_two_hid_forward(x, w1, b1, w2, b2, *, block_b=None, io_dtype=None,
                        precision=None, x_transposed=False,
                        return_transposed=False):
    """AnnTwoHid forward: relu(relu(x @ w1.T + b1.T) @ w2.T + b2.T).

    x: (B, 4) f32 (or (4, B) if x_transposed=True).
    w1: (16, 4), b1: (16, 1), w2: (12, 16), b2: (12, 1) in PyTorch (out, in) layout.
    Returns (B, 12) (or (12, B) if return_transposed=True), dtype io_dtype or f32.

    io_dtype=jnp.bfloat16 halves HBM traffic (kernel is bandwidth-bound) while
    keeping f32 accumulation; precision=jax.lax.Precision.HIGHEST restores
    true-f32 matmul parity with PyTorch at negligible cost.
    """
    if block_b is None:
        block_b = _default_block_b()

    # Lane-dense layout: batch on the last axis.  No padding — partial boundary
    # blocks are handled by Pallas, so ragged batches cost no extra HBM traffic.
    x_t = x if x_transposed else x.T                                    # (4, B)
    if io_dtype is not None and x_t.dtype != io_dtype:
        x_t = x_t.astype(io_dtype)   # fuses with the transpose copy in XLA
    out_dtype = io_dtype if io_dtype is not None else jnp.float32
    B = x_t.shape[1]

    # Lane tile: always a multiple of 128 (dense vst), never larger than needed.
    tb = min(_round_up(block_b, 128), _round_up(B, 128))
    n_blocks = pl.cdiv(B, tb)
    # If one block would cover the whole batch, split it so the "parallel" grid
    # axis can occupy both v7x TensorCores (extra step overhead is negligible).
    if n_blocks == 1 and B > 128:
        tb = _round_up(pl.cdiv(B, 2), 128)
        n_blocks = pl.cdiv(B, tb)

    # Default scoped-VMEM limits (16/32 MiB) cover tb<=32768/65536; only raise
    # it when a caller forces larger tiles.
    vmem_limit = (48 * 1024 * 1024) if tb > 32768 else None

    kernel = functools.partial(_mlp_kernel, precision=precision)

    y_t = pl.pallas_call(
        kernel,
        out_shape=jax.ShapeDtypeStruct((HID2, B), out_dtype),
        grid_spec=pltpu.PrefetchScalarGridSpec(
            num_scalar_prefetch=0,
            grid=(n_blocks,),
            in_specs=[
                pl.BlockSpec((INPUT_SIZE, tb), lambda i: (0, i)),       # x tile
                pl.BlockSpec((HID1, INPUT_SIZE), lambda i: (0, 0)),     # w1 (resident)
                pl.BlockSpec((HID1, 1), lambda i: (0, 0)),              # b1 (resident)
                pl.BlockSpec((HID2, HID1), lambda i: (0, 0)),           # w2 (resident)
                pl.BlockSpec((HID2, 1), lambda i: (0, 0)),              # b2 (resident)
            ],
            out_specs=pl.BlockSpec((HID2, tb), lambda i: (0, i)),
            # NOTE: pipeline depth >2 (pl.Buffered(3)) only if a profile shows
            # exposed DMA between steps; default double-buffering suffices here.
        ),
        compiler_params=pltpu.CompilerParams(
            dimension_semantics=("parallel",),  # independent batch tiles -> 2 TCs on v7x
            vmem_limit_bytes=vmem_limit,
        ),
    )(x_t, w1, b1, w2, b2)

    return y_t if return_transposed else y_t.T                          # (B, 12)


def init_params(key):
    """Deterministic init mimicking nn.Linear's uniform(-1/sqrt(fan_in), +),
    stored in PyTorch (out_features, in_features) layout."""
    k1, k2, k3, k4, k5, k6 = jax.random.split(key, 6)

    def lin(kw, kb, fan_in, fan_out):
        bound = 1.0 / jnp.sqrt(float(fan_in))
        w = jax.random.uniform(kw, (fan_out, fan_in), jnp.float32, -bound, bound)
        b = jax.random.uniform(kb, (fan_out, 1), jnp.float32, -bound, bound)
        return w, b

    w1, b1 = lin(k1, k2, INPUT_SIZE, HID1)
    w2, b2 = lin(k3, k4, HID1, HID2)
    # my_SecondHiddenLayer: constructed but never used in forward().
    w3, b3 = lin(k5, k6, HID2, OUTPUT_SIZE)
    return (w1, b1, w2, b2, w3, b3)


def _reference(x, w1, b1, w2, b2):
    return jnp.maximum(jnp.maximum(x @ w1.T + b1.T, 0.0) @ w2.T + b2.T, 0.0)


if __name__ == "__main__":
    key = jax.random.PRNGKey(0)
    kx, kp = jax.random.split(key)
    w1, b1, w2, b2, w3, b3 = init_params(kp)

    # 1) Small batch, f32 I/O (single lane-partial block, B=8 < 128).
    B = 8
    x = jax.random.normal(kx, (B, INPUT_SIZE), jnp.float32)
    y = jax.block_until_ready(ann_two_hid_forward(x, w1, b1, w2, b2))
    ref = _reference(x, w1, b1, w2, b2)
    assert y.shape == (B, HID2)
    assert jnp.allclose(y, ref, atol=1e-5, rtol=1e-5)

    # 2) Ragged batch: multi-block pipelining + a partial last block, no padding.
    B2 = 300
    x2 = jax.random.normal(kx, (B2, INPUT_SIZE), jnp.float32)
    ref2 = _reference(x2, w1, b1, w2, b2)
    y2 = jax.block_until_ready(ann_two_hid_forward(x2, w1, b1, w2, b2, block_b=128))
    assert y2.shape == (B2, HID2)
    assert jnp.allclose(y2, ref2, atol=1e-5, rtol=1e-5)

    # 3) Caller-managed (features, batch) layout: zero wrapper transpose passes.
    y3_t = jax.block_until_ready(
        ann_two_hid_forward(x2.T, w1, b1, w2, b2, block_b=256,
                            x_transposed=True, return_transposed=True))
    assert y3_t.shape == (HID2, B2)
    assert jnp.allclose(y3_t.T, ref2, atol=1e-5, rtol=1e-5)

    # 4) bf16 HBM I/O (f32 accumulation in-kernel); looser tolerance.
    y4 = jax.block_until_ready(
        ann_two_hid_forward(x2, w1, b1, w2, b2, io_dtype=jnp.bfloat16))
    assert y4.shape == (B2, HID2) and y4.dtype == jnp.bfloat16
    assert jnp.allclose(y4.astype(jnp.float32), ref2, atol=1e-1, rtol=5e-2)

    print("KERNEL_OK")
</pallas_src>

<mosaic_0001>
module attributes {stable_mosaic.version = 11 : i64} {
  func.func @_mlp_kernel(%arg0: i32, %arg1: memref<4x128xf32, #tpu.memory_space<vmem>>, %arg2: memref<16x4xf32, #tpu.memory_space<vmem>>, %arg3: memref<16x1xf32, #tpu.memory_space<vmem>>, %arg4: memref<12x16xf32, #tpu.memory_space<vmem>>, %arg5: memref<12x1xf32, #tpu.memory_space<vmem>>, %arg6: memref<12x128xf32, #tpu.memory_space<vmem>>) attributes {dimension_semantics = [#tpu.dimension_semantics<parallel>], iteration_bounds = array<i64: 1>, scalar_prefetch = 0 : i64, scratch_operands = 0 : i64, tpu.core_type = #tpu.core_type<tc>, window_params = [{transform_indices = @transform_0, window_bounds = array<i64: 4, 128>}, {pipeline_mode = #tpu.pipeline_mode<synchronous>, transform_indices = @transform_1, window_bounds = array<i64: 16, 4>}, {pipeline_mode = #tpu.pipeline_mode<synchronous>, transform_indices = @transform_2, window_bounds = array<i64: 16, 1>}, {pipeline_mode = #tpu.pipeline_mode<synchronous>, transform_indices = @transform_3, window_bounds = array<i64: 12, 16>}, {pipeline_mode = #tpu.pipeline_mode<synchronous>, transform_indices = @transform_4, window_bounds = array<i64: 12, 1>}, {transform_indices = @transform_5, window_bounds = array<i64: 12, 128>}]} {
    %c0 = arith.constant 0 : index
    %c0_0 = arith.constant 0 : index
    %0 = vector.load %arg1[%c0, %c0_0] : memref<4x128xf32, #tpu.memory_space<vmem>>, vector<4x128xf32>
    %c0_1 = arith.constant 0 : index
    %c0_2 = arith.constant 0 : index
    %1 = vector.load %arg2[%c0_1, %c0_2] : memref<16x4xf32, #tpu.memory_space<vmem>>, vector<16x4xf32>
    %cst = arith.constant dense<0.000000e+00> : vector<16x128xf32>
    %2 = tpu.matmul %1, %0, %cst {dimension_numbers = #tpu.dot_dimension_numbers<[1], [0], [0], [1], [0, 0, 1, 1], [], []>} : vector<16x4xf32>, vector<4x128xf32>, vector<16x128xf32> -> vector<16x128xf32>
    %c0_3 = arith.constant 0 : index
    %c0_4 = arith.constant 0 : index
    %3 = vector.load %arg3[%c0_3, %c0_4] : memref<16x1xf32, #tpu.memory_space<vmem>>, vector<16x1xf32>
    %4 = vector.broadcast %3 : vector<16x1xf32> to vector<16x128xf32>
    %5 = arith.addf %2, %4 : vector<16x128xf32>
    %cst_5 = arith.constant 0.000000e+00 : f32
    %6 = vector.broadcast %cst_5 : f32 to vector<16x128xf32>
    %7 = arith.maximumf %5, %6 : vector<16x128xf32>
    %c0_6 = arith.constant 0 : index
    %c0_7 = arith.constant 0 : index
    %8 = vector.load %arg4[%c0_6, %c0_7] : memref<12x16xf32, #tpu.memory_space<vmem>>, vector<12x16xf32>
    %cst_8 = arith.constant dense<0.000000e+00> : vector<12x128xf32>
    %9 = tpu.matmul %8, %7, %cst_8 {dimension_numbers = #tpu.dot_dimension_numbers<[1], [0], [0], [1], [0, 0, 1, 1], [], []>} : vector<12x16xf32>, vector<16x128xf32>, vector<12x128xf32> -> vector<12x128xf32>
    %c0_9 = arith.constant 0 : index
    %c0_10 = arith.constant 0 : index
    %10 = vector.load %arg5[%c0_9, %c0_10] : memref<12x1xf32, #tpu.memory_space<vmem>>, vector<12x1xf32>
    %11 = vector.broadcast %10 : vector<12x1xf32> to vector<12x128xf32>
    %12 = arith.addf %9, %11 : vector<12x128xf32>
    %cst_11 = arith.constant 0.000000e+00 : f32
    %13 = vector.broadcast %cst_11 : f32 to vector<12x128xf32>
    %14 = arith.maximumf %12, %13 : vector<12x128xf32>
    %c0_12 = arith.constant 0 : index
    %c0_13 = arith.constant 0 : index
    %15 = vector.load %arg6[%c0_12, %c0_13] : memref<12x128xf32, #tpu.memory_space<vmem>>, vector<12x128xf32>
    tpu.vector_store %arg6[%c0_12, %c0_13], %14 {strides = array<i32>} : memref<12x128xf32, #tpu.memory_space<vmem>>, vector<12x128xf32>,
    return
  }
  func.func @transform_0(%arg0: i32) -> (i32, i32) {
    %c0_i32 = arith.constant 0 : i32
    %c0_i32_0 = arith.constant 0 : i32
    return %c0_i32, %arg0 : i32, i32
  }
  func.func @transform_1(%arg0: i32) -> (i32, i32) {
    %c0_i32 = arith.constant 0 : i32
    %c0_i32_0 = arith.constant 0 : i32
    %c0_i32_1 = arith.constant 0 : i32
    return %c0_i32, %c0_i32_0 : i32, i32
  }
  func.func @transform_2(%arg0: i32) -> (i32, i32) {
    %c0_i32 = arith.constant 0 : i32
    %c0_i32_0 = arith.constant 0 : i32
    %c0_i32_1 = arith.constant 0 : i32
    return %c0_i32, %c0_i32_0 : i32, i32
  }
  func.func @transform_3(%arg0: i32) -> (i32, i32) {
    %c0_i32 = arith.constant 0 : i32
    %c0_i32_0 = arith.constant 0 : i32
    %c0_i32_1 = arith.constant 0 : i32
    return %c0_i32, %c0_i32_0 : i32, i32
  }
  func.func @transform_4(%arg0: i32) -> (i32, i32) {
    %c0_i32 = arith.constant 0 : i32
    %c0_i32_0 = arith.constant 0 : i32
    %c0_i32_1 = arith.constant 0 : i32
    return %c0_i32, %c0_i32_0 : i32, i32
  }
  func.func @transform_5(%arg0: i32) -> (i32, i32) {
    %c0_i32 = arith.constant 0 : i32
    %c0_i32_0 = arith.constant 0 : i32
    return %c0_i32, %arg0 : i32, i32
  }
}

</mosaic_0001>

<llo_original>
// kernel: tpu_custom_call.1
$region0: #{tpu_custom_call.1}
  #allocation0 [shape = 'u32[]', space=smem, size = 0x4, offset = 0x4, fixed_abs, tag = 'smem constant byte address 0x4 - core index']
  #allocation1 [shape = 'u32[144,128]{1,0:T(1,128)}', space=vmem, size = 0x12000, scoped, tag = 'internal scratch']
  %s0 = inlined_call_operand.vmem [shape: f32[4,8], index: 0, kind: input, shape index: {}]
  %s1 = inlined_call_operand.vmem [shape: f32[16,4], index: 1, kind: input, shape index: {}]
  %s2 = inlined_call_operand.vmem [shape: f32[16,1], index: 2, kind: input, shape index: {}]
  %s3 = inlined_call_operand.vmem [shape: f32[12,16], index: 3, kind: input, shape index: {}]
  %s4 = inlined_call_operand.vmem [shape: f32[12,1], index: 4, kind: input, shape index: {}]
  %s5 = inlined_call_operand.vmem [shape: f32[12,8], index: 5, kind: output, shape index: {}]
  %s6 = sld [smem:[#allocation0]]
  $region30: #{tpu_custom_call.1} parent=0
    _
  %s8 = ssub.s32 1, %s6
  %s9 = scalar_select 0, %s8, %s6
  // Predicated region
  $region2: #{tpu_custom_call.1} parent=0 // pred_check
    _
  $region3: #{tpu_custom_call.1} parent=0 // pred_check_branch
    %11 = sbr.rel (0) target = $region5
  $region4: #{tpu_custom_call.1} parent=0 // pred_region
    _
  $region5: #{tpu_custom_call.1} parent=0 // pred_fallthru
    _
  // Predicated region
  $region6: #{tpu_custom_call.1} parent=0 // pred_check
    _
  $region7: #{tpu_custom_call.1} parent=0 // pred_check_branch
    %13 = sbr.rel (0) target = $region9
  $region8: #{tpu_custom_call.1} parent=0 // pred_region
    _
  $region9: #{tpu_custom_call.1} parent=0 // pred_fallthru
    _
  // Predicated region
  $region10: #{tpu_custom_call.1} parent=0 // pred_check
    _
  $region11: #{tpu_custom_call.1} parent=0 // pred_check_branch
    %15 = sbr.rel (0) target = $region13
  $region12: #{tpu_custom_call.1} parent=0 // pred_region
    _
  $region13: #{tpu_custom_call.1} parent=0 // pred_fallthru
    _
  // Predicated region
  $region14: #{tpu_custom_call.1} parent=0 // pred_check
    _
  $region15: #{tpu_custom_call.1} parent=0 // pred_check_branch
    %17 = sbr.rel (0) target = $region17
  $region16: #{tpu_custom_call.1} parent=0 // pred_region
    _
  $region17: #{tpu_custom_call.1} parent=0 // pred_fallthru
    _
  // Predicated region
  $region18: #{tpu_custom_call.1} parent=0 // pred_check
    _
  $region19: #{tpu_custom_call.1} parent=0 // pred_check_branch
    %19 = sbr.rel (0) target = $region21
  $region20: #{tpu_custom_call.1} parent=0 // pred_region
    _
  $region21: #{tpu_custom_call.1} parent=0 // pred_fallthru
    _
  %v20 = vld [vmem:[%s0] sm:$0xf]
  %v21 = vld [vmem:[%s1] sm:$0xff]
  %v22 = vld [vmem:[%s1 + $0x8] sm:$0xff]
  %v23 = vld [vmem:[%s2] sm:$0xff]
  %v24 = vld [vmem:[%s2 + $0x8] sm:$0xff]
  %26 = vset.pattern.permute.xlu0 0
  %27 = vperm.xlu0 %26, %v23
  %v28 = vpop.permute.xlu0 %27
  %31 = vset.pattern.permute.xlu0 0
  %32 = vperm.xlu0 %31, %v24
  %v33 = vpop.permute.xlu0 %32
  %vm35 = vcmask 31744
  %v37 = vsel %vm35, %v21, 0
  %v40 = vsel %vm35, %v22, 0
  %vm42 = vcmask 1043456
  %v44 = vsel %vm42, %v20, 0
  %46 = vmatprep.subr.mxu0 0.0
  %47 = vmatpush1.msra.mxu0 %v44
  %48 = vmatprep.subr.mxu0 0.0
  %49 = vmatpush1.msra.mxu0 0.0
  %50 = vmatprep.subr.mxu0 0.0
  %51 = vmatpush1.msra.mxu0 0.0
  %52 = vmatprep.subr.mxu0 0.0
  %53 = vmatpush1.msra.mxu0 0.0
  %54 = vmatprep.subr.mxu0 0.0
  %55 = vmatpush1.msra.mxu0 0.0
  %56 = vmatprep.subr.mxu0 0.0
  %57 = vmatpush1.msra.mxu0 0.0
  %58 = vmatprep.subr.mxu0 0.0
  %59 = vmatpush1.msra.mxu0 0.0
  %60 = vmatprep.subr.mxu0 0.0
  %61 = vmatpush1.msra.mxu0 0.0
  %62 = vmatprep.subr.mxu0 0.0
  %63 = vmatpush1.msra.mxu0 0.0
  %64 = vmatprep.subr.mxu0 0.0
  %65 = vmatpush1.msra.mxu0 0.0
  %66 = vmatprep.subr.mxu0 0.0
  %67 = vmatpush1.msra.mxu0 0.0
  %68 = vmatprep.subr.mxu0 0.0
  %69 = vmatpush1.msra.mxu0 0.0
  %70 = vmatprep.subr.mxu0 0.0
  %71 = vmatpush1.msra.mxu0 0.0
  %72 = vmatprep.subr.mxu0 0.0
  %73 = vmatpush1.msra.mxu0 0.0
  %74 = vmatprep.subr.mxu0 0.0
  %75 = vmatpush1.msra.mxu0 0.0
  %76 = vmatprep.subr.mxu0 0.0
  %77 = vmatpush1.msra.mxu0 0.0
  %78 = vmatprep.subr.mxu0 0.0
  %79 = vmatpush1.msra.mxu0 0.0
  %80 = vmatprep.subr.mxu0 0.0
  %81 = vmatpush1.msra.mxu0 0.0
  %82 = vmatprep.subr.mxu0 0.0
  %83 = vmatpush1.msra.mxu0 0.0
  %84 = vmatprep.subr.mxu0 0.0
  %85 = vmatpush1.msra.mxu0 0.0
  %86 = vmatprep.subr.mxu0 0.0
  %87 = vmatpush1.msra.mxu0 0.0
  %88 = vmatprep.subr.mxu0 0.0
  %89 = vmatpush1.msra.mxu0 0.0
  %90 = vmatprep.subr.mxu0 0.0
  %91 = vmatpush1.msra.mxu0 0.0
  %92 = vmatprep.subr.mxu0 0.0
  %93 = vmatpush1.msra.mxu0 0.0
  %94 = vmatprep.subr.mxu0 0.0
  %95 = vmatpush1.msra.mxu0 0.0
  %96 = vmatprep.subr.mxu0 0.0
  %97 = vmatpush1.msra.mxu0 0.0
  %98 = vmatprep.subr.mxu0 0.0
  %99 = vmatpush1.msra.mxu0 0.0
  %100 = vmatprep.subr.mxu0 0.0
  %101 = vmatpush1.msra.mxu0 0.0
  %102 = vmatprep.subr.mxu0 0.0
  %103 = vmatpush1.msra.mxu0 0.0
  %104 = vmatprep.subr.mxu0 0.0
  %105 = vmatpush1.msra.mxu0 0.0
  %106 = vmatprep.subr.mxu0 0.0
  %107 = vmatpush1.msra.mxu0 0.0
  %108 = vmatprep.subr.mxu0 0.0
  %109 = vmatpush1.msra.mxu0 0.0
  %110 = vmatprep.mubr.f32.mxu0 0.0
  %111 = vmatmul.mubr.f32.gmra.mrb[0].mxu0 %v37
  %v112 = vpop.f32.mrb[0].mxu0
  %v113 = vadd.f32 %v28, %v112
  %v114 = vpop.f32.mrb[0].mxu0
  %115 = vmatprep.mubr.f32.mxu0 0.0
  %116 = vmatmul.mubr.f32.gmra.mrb[0].mxu0 %v40
  %v117 = vpop.f32.mrb[0].mxu0
  %v118 = vadd.f32 %v33, %v117
  %v119 = vpop.f32.mrb[0].mxu0
  %120 = vdwg.mxu0
  %v121 = vmax.f32 %v113, 0.0
  %v122 = vmax.f32 %v118, 0.0
  %v123 = vld [vmem:[%s3] sm:$0xff]
  %v124 = vld [vmem:[%s3 + $0x8] sm:$0xf]
  %v125 = vld [vmem:[%s4] sm:$0xff]
  %v126 = vld [vmem:[%s4 + $0x8] sm:$0xf]
  %128 = vset.pattern.permute.xlu0 0
  %129 = vperm.xlu0 %128, %v125
  %v130 = vpop.permute.xlu0 %129
  %133 = vset.pattern.permute.xlu0 0
  %134 = vperm.xlu0 %133, %v126
  %v135 = vpop.permute.xlu0 %134
  %vm137 = vcmask 130048
  %v139 = vsel %vm137, %v123, 0
  %v142 = vsel %vm137, %v124, 0
  %144 = vmatprep.subr.mxu0 0.0
  %145 = vmatpush1.msra.mxu0 %v121
  %146 = vmatprep.subr.mxu0 0.0
  %147 = vmatpush1.msra.mxu0 %v122
  %148 = vmatprep.subr.mxu0 0.0
  %149 = vmatpush1.msra.mxu0 0.0
  %150 = vmatprep.subr.mxu0 0.0
  %151 = vmatpush1.msra.mxu0 0.0
  %152 = vmatprep.subr.mxu0 0.0
  %153 = vmatpush1.msra.mxu0 0.0
  %154 = vmatprep.subr.mxu0 0.0
  %155 = vmatpush1.msra.mxu0 0.0
  %156 = vmatprep.subr.mxu0 0.0
  %157 = vmatpush1.msra.mxu0 0.0
  %158 = vmatprep.subr.mxu0 0.0
  %159 = vmatpush1.msra.mxu0 0.0
  %160 = vmatprep.subr.mxu0 0.0
  %161 = vmatpush1.msra.mxu0 0.0
  %162 = vmatprep.subr.mxu0 0.0
  %163 = vmatpush1.msra.mxu0 0.0
  %164 = vmatprep.subr.mxu0 0.0
  %165 = vmatpush1.msra.mxu0 0.0
  %166 = vmatprep.subr.mxu0 0.0
  %167 = vmatpush1.msra.mxu0 0.0
  %168 = vmatprep.subr.mxu0 0.0
  %169 = vmatpush1.msra.mxu0 0.0
  %170 = vmatprep.subr.mxu0 0.0
  %171 = vmatpush1.msra.mxu0 0.0
  %172 = vmatprep.subr.mxu0 0.0
  %173 = vmatpush1.msra.mxu0 0.0
  %174 = vmatprep.subr.mxu0 0.0
  %175 = vmatpush1.msra.mxu0 0.0
  %176 = vmatprep.subr.mxu0 0.0
  %177 = vmatpush1.msra.mxu0 0.0
  %178 = vmatprep.subr.mxu0 0.0
  %179 = vmatpush1.msra.mxu0 0.0
  %180 = vmatprep.subr.mxu0 0.0
  %181 = vmatpush1.msra.mxu0 0.0
  %182 = vmatprep.subr.mxu0 0.0
  %183 = vmatpush1.msra.mxu0 0.0
  %184 = vmatprep.subr.mxu0 0.0
  %185 = vmatpush1.msra.mxu0 0.0
  %186 = vmatprep.subr.mxu0 0.0
  %187 = vmatpush1.msra.mxu0 0.0
  %188 = vmatprep.subr.mxu0 0.0
  %189 = vmatpush1.msra.mxu0 0.0
  %190 = vmatprep.subr.mxu0 0.0
  %191 = vmatpush1.msra.mxu0 0.0
  %192 = vmatprep.subr.mxu0 0.0
  %193 = vmatpush1.msra.mxu0 0.0
  %194 = vmatprep.subr.mxu0 0.0
  %195 = vmatpush1.msra.mxu0 0.0
  %196 = vmatprep.subr.mxu0 0.0
  %197 = vmatpush1.msra.mxu0 0.0
  %198 = vmatprep.subr.mxu0 0.0
  %199 = vmatpush1.msra.mxu0 0.0
  %200 = vmatprep.subr.mxu0 0.0
  %201 = vmatpush1.msra.mxu0 0.0
  %202 = vmatprep.subr.mxu0 0.0
  %203 = vmatpush1.msra.mxu0 0.0
  %204 = vmatprep.subr.mxu0 0.0
  %205 = vmatpush1.msra.mxu0 0.0
  %206 = vmatprep.subr.mxu0 0.0
  %207 = vmatpush1.msra.mxu0 0.0
  %208 = vmatprep.mubr.f32.mxu0 0.0
  %209 = vmatmul.mubr.f32.gmra.mrb[0].mxu0 %v139
  %v210 = vpop.f32.mrb[0].mxu0
  %v211 = vadd.f32 %v130, %v210
  %v212 = vpop.f32.mrb[0].mxu0
  %213 = vmatprep.mubr.f32.mxu0 0.0
  %214 = vmatmul.mubr.f32.gmra.mrb[0].mxu0 %v142
  %v215 = vpop.f32.mrb[0].mxu0
  %v216 = vadd.f32 %v135, %v215
  %v217 = vpop.f32.mrb[0].mxu0
  %218 = vdwg.mxu0
  %v219 = vmax.f32 %v211, 0.0
  %v220 = vmax.f32 %v216, 0.0
  %221 = vst [vmem:[%s5] sm:$0xff] %v219
  %222 = vst [vmem:[%s5 + $0x8] sm:$0xf] %v220
  // Predicated region
  $region22: #{tpu_custom_call.1} parent=0 // pred_check
    _
  $region23: #{tpu_custom_call.1} parent=0 // pred_check_branch
    %224 = sbr.rel (0) target = $region25
  $region24: #{tpu_custom_call.1} parent=0 // pred_region
    _
  $region25: #{tpu_custom_call.1} parent=0 // pred_fallthru
    _
  // Predicated region
  $region26: #{tpu_custom_call.1} parent=0 // pred_check
    _
  $region27: #{tpu_custom_call.1} parent=0 // pred_check_branch
    %226 = sbr.rel (0) target = $region29
  $region28: #{tpu_custom_call.1} parent=0 // pred_region
    _
  $region29: #{tpu_custom_call.1} parent=0 // pred_fallthru
    _

</llo_original>
